<compile_context>
chip_gen: v7x
topology: tpu7x:2x2x1
jax: 0.10.0
libtpu: 0.0.40
codegen_flags: <defaults>
</compile_context>

<pallas_src>
import functools
import math

import jax
import jax.numpy as jnp
from jax.experimental import pallas as pl
from jax.experimental.pallas import tpu as pltpu


_VMEM_LIMIT = 64 * 1024 * 1024
_SQRT_2_OVER_PI = 0.7978845608028654


def _round_up(x, m):
    return (x + m - 1) // m * m


def _compiler_params():
    return pltpu.CompilerParams(
        dimension_semantics=("parallel",),
        vmem_limit_bytes=_VMEM_LIMIT,
    )


# ---------------------------------------------------------------------------
# Kernels
# ---------------------------------------------------------------------------
def _linear_kernel(x_ref, w_ref, b_ref, o_ref, *, activation):
    # Matmul in the operands' native dtype (bf16-ready), f32 accumulation.
    y = jnp.dot(x_ref[...], w_ref[...], preferred_element_type=jnp.float32)
    y = y + b_ref[...]
    if activation == "gelu":
        y = 0.5 * y * (1.0 + jnp.tanh(_SQRT_2_OVER_PI * (y + 0.044715 * y * y * y)))
    o_ref[...] = y.astype(o_ref.dtype)


def _dense_residual_ln_kernel(x_ref, res_ref, w_ref, b_ref, g_ref, beta_ref,
                              o_ref, *, eps):
    # y = x @ W^T + b ; z = residual + y ; out = LayerNorm(z)
    y = jnp.dot(x_ref[...], w_ref[...], preferred_element_type=jnp.float32)
    z = y + b_ref[...] + res_ref[...].astype(jnp.float32)
    # One-pass LayerNorm statistics (f32).
    mean = jnp.mean(z, axis=-1, keepdims=True)
    mean_sq = jnp.mean(z * z, axis=-1, keepdims=True)
    var = mean_sq - mean * mean
    inv = jax.lax.rsqrt(var + eps)
    o_ref[...] = ((z - mean) * inv * g_ref[...] + beta_ref[...]).astype(o_ref.dtype)


def _attention_kernel(q_ref, k_ref, v_ref, o_ref, *, scale):
    # q/k/v: (S, hs) for one (batch, head) pair.
    s = jax.lax.dot_general(
        q_ref[...], k_ref[...],
        dimension_numbers=(((1,), (1,)), ((), ())),
        preferred_element_type=jnp.float32,
    ) * scale
    m = jnp.max(s, axis=-1, keepdims=True)
    p = jnp.exp(s - m)
    p = p / jnp.sum(p, axis=-1, keepdims=True)
    o = jnp.dot(p.astype(v_ref.dtype), v_ref[...],
                preferred_element_type=jnp.float32)
    o_ref[...] = o.astype(o_ref.dtype)


# ---------------------------------------------------------------------------
# Wrappers (row-tiled pallas_calls)
# ---------------------------------------------------------------------------
def _row_tiling(M, tm):
    tm_eff = min(tm, _round_up(M, 8))          # never over-tile tiny inputs
    Mp = _round_up(M, tm_eff)                  # pad instead of asserting
    return tm_eff, Mp


def _pad_rows(x2, Mp):
    M = x2.shape[0]
    if Mp == M:
        return x2
    return jnp.pad(x2, ((0, Mp - M), (0, 0)))


def pallas_linear(x2, w_t, bias, *, activation=None, tm=256):
    """x2: (M, K); w_t: (K, N) = W.T; bias: (N,) -> (M, N)."""
    M, K = x2.shape
    N = w_t.shape[1]
    tm_eff, Mp = _row_tiling(M, tm)
    xp = _pad_rows(x2, Mp)
    w2 = w_t.astype(x2.dtype)                  # feed MXU in activation dtype
    b2 = bias.reshape(1, N).astype(jnp.float32)

    out = pl.pallas_call(
        functools.partial(_linear_kernel, activation=activation),
        out_shape=jax.ShapeDtypeStruct((Mp, N), x2.dtype),
        grid_spec=pltpu.PrefetchScalarGridSpec(
            num_scalar_prefetch=0,
            grid=(Mp // tm_eff,),
            in_specs=[
                pl.BlockSpec((tm_eff, K), lambda i: (i, 0)),   # x tile
                pl.BlockSpec((K, N), lambda i: (0, 0)),        # weight (resident)
                pl.BlockSpec((1, N), lambda i: (0, 0)),        # bias
            ],
            out_specs=pl.BlockSpec((tm_eff, N), lambda i: (i, 0)),
        ),
        compiler_params=_compiler_params(),
    )(xp, w2, b2)
    return out[:M] if Mp != M else out


def pallas_dense_residual_ln(x2, res2, w_t, bias, gamma, beta, *, eps=1e-12,
                             tm=256):
    """LayerNorm(res2 + (x2 @ w_t + bias)).  x2: (M,K); res2: (M,H); w_t: (K,H)."""
    M, K = x2.shape
    H = w_t.shape[1]
    tm_eff, Mp = _row_tiling(M, tm)
    xp = _pad_rows(x2, Mp)
    rp = _pad_rows(res2, Mp)
    w2 = w_t.astype(x2.dtype)
    b2 = bias.reshape(1, H).astype(jnp.float32)
    g2 = gamma.reshape(1, H).astype(jnp.float32)
    be2 = beta.reshape(1, H).astype(jnp.float32)

    out = pl.pallas_call(
        functools.partial(_dense_residual_ln_kernel, eps=eps),
        out_shape=jax.ShapeDtypeStruct((Mp, H), x2.dtype),
        grid_spec=pltpu.PrefetchScalarGridSpec(
            num_scalar_prefetch=0,
            grid=(Mp // tm_eff,),
            in_specs=[
                pl.BlockSpec((tm_eff, K), lambda i: (i, 0)),   # dense input tile
                pl.BlockSpec((tm_eff, H), lambda i: (i, 0)),   # residual tile
                pl.BlockSpec((K, H), lambda i: (0, 0)),        # weight (resident)
                pl.BlockSpec((1, H), lambda i: (0, 0)),        # bias
                pl.BlockSpec((1, H), lambda i: (0, 0)),        # LN gamma
                pl.BlockSpec((1, H), lambda i: (0, 0)),        # LN beta
            ],
            out_specs=pl.BlockSpec((tm_eff, H), lambda i: (i, 0)),
        ),
        compiler_params=_compiler_params(),
    )(xp, rp, w2, b2, g2, be2)
    return out[:M] if Mp != M else out


def pallas_attention(q2, k2, v2, B, S, n_head, hs):
    """q2/k2/v2: (B*S, H).  Returns (B*S, H) after non-causal SDPA."""
    def split_heads(t):
        return t.reshape(B, S, n_head, hs).transpose(0, 2, 1, 3).reshape(
            B * n_head, S, hs)

    q3, k3, v3 = split_heads(q2), split_heads(k2), split_heads(v2)
    scale = 1.0 / math.sqrt(hs)

    out = pl.pallas_call(
        functools.partial(_attention_kernel, scale=scale),
        out_shape=jax.ShapeDtypeStruct((B * n_head, S, hs), q2.dtype),
        grid_spec=pltpu.PrefetchScalarGridSpec(
            num_scalar_prefetch=0,
            grid=(B * n_head,),
            in_specs=[
                pl.BlockSpec((None, S, hs), lambda i: (i, 0, 0)),
                pl.BlockSpec((None, S, hs), lambda i: (i, 0, 0)),
                pl.BlockSpec((None, S, hs), lambda i: (i, 0, 0)),
            ],
            out_specs=pl.BlockSpec((None, S, hs), lambda i: (i, 0, 0)),
        ),
        compiler_params=_compiler_params(),
    )(q3, k3, v3)
    return out.reshape(B, n_head, S, hs).transpose(0, 2, 1, 3).reshape(B * S,
                                                                       n_head * hs)


# ---------------------------------------------------------------------------
# Full BertLayer forward
# ---------------------------------------------------------------------------
def bert_layer(x, p, *, n_head, tm=256, eps=1e-12):
    """x: (B, S, H).  p: dict of transposed weights (in, out) and biases."""
    B, S, H = x.shape
    hs = H // n_head
    M = B * S
    x2 = x.reshape(M, H)

    # --- BertSdpaSelfAttention -------------------------------------------
    w_qkv_t = jnp.concatenate([p["w_q_t"], p["w_k_t"], p["w_v_t"]], axis=1)
    b_qkv = jnp.concatenate([p["b_q"], p["b_k"], p["b_v"]])
    qkv = pallas_linear(x2, w_qkv_t, b_qkv, tm=tm)          # (M, 3H)
    q2, k2, v2 = qkv[:, :H], qkv[:, H:2 * H], qkv[:, 2 * H:]
    attn = pallas_attention(q2, k2, v2, B, S, n_head, hs)   # (M, H)

    # --- BertSelfOutput: dense + residual(x) + LayerNorm -------------------
    h1 = pallas_dense_residual_ln(attn, x2, p["w_ao_t"], p["b_ao"],
                                  p["ln1_g"], p["ln1_b"], eps=eps, tm=tm)

    # --- BertIntermediate: dense to 4H + GELU ------------------------------
    inter = pallas_linear(h1, p["w_i_t"], p["b_i"], activation="gelu", tm=tm)

    # --- BertOutput: dense 4H->H + residual(h1) + LayerNorm ----------------
    h2 = pallas_dense_residual_ln(inter, h1, p["w_o_t"], p["b_o"],
                                  p["ln2_g"], p["ln2_b"], eps=eps, tm=tm)
    return h2.reshape(B, S, H)


# ---------------------------------------------------------------------------
# Pure-JAX reference (same math as the PyTorch module)
# ---------------------------------------------------------------------------
def reference_bert_layer(x, p, *, n_head, eps=1e-12):
    B, S, H = x.shape
    hs = H // n_head
    scale = 1.0 / math.sqrt(hs)

    def linear(t, w_t, b):
        return jnp.einsum("bsi,io->bso", t, w_t) + b

    def layer_norm(z, g, b):
        z = z.astype(jnp.float32)
        mean = jnp.mean(z, axis=-1, keepdims=True)
        var = jnp.mean((z - mean) ** 2, axis=-1, keepdims=True)
        return (z - mean) * jax.lax.rsqrt(var + eps) * g + b

    q = linear(x, p["w_q_t"], p["b_q"]).reshape(B, S, n_head, hs).transpose(0, 2, 1, 3)
    k = linear(x, p["w_k_t"], p["b_k"]).reshape(B, S, n_head, hs).transpose(0, 2, 1, 3)
    v = linear(x, p["w_v_t"], p["b_v"]).reshape(B, S, n_head, hs).transpose(0, 2, 1, 3)
    s = jnp.einsum("bhqd,bhkd->bhqk", q, k) * scale
    a = jax.nn.softmax(s, axis=-1)
    y = jnp.einsum("bhqk,bhkd->bhqd", a, v).transpose(0, 2, 1, 3).reshape(B, S, H)

    h1 = layer_norm(x + linear(y, p["w_ao_t"], p["b_ao"]), p["ln1_g"], p["ln1_b"])
    z = linear(h1, p["w_i_t"], p["b_i"])
    z = 0.5 * z * (1.0 + jnp.tanh(_SQRT_2_OVER_PI * (z + 0.044715 * z ** 3)))
    h2 = layer_norm(h1 + linear(z, p["w_o_t"], p["b_o"]), p["ln2_g"], p["ln2_b"])
    return h2


if __name__ == "__main__":
    B, S, H, n_head = 2, 8, 32, 4
    key = jax.random.PRNGKey(0)
    keys = jax.random.split(key, 16)
    x = jax.random.normal(keys[0], (B, S, H), dtype=jnp.float32)

    def linear_init(kw, kb, fan_in, fan_out):
        bound = 1.0 / math.sqrt(fan_in)
        w = jax.random.uniform(kw, (fan_out, fan_in), jnp.float32, -bound, bound)
        b = jax.random.uniform(kb, (fan_out,), jnp.float32, -bound, bound)
        return w.T, b                                   # store W.T (in, out)

    p = {}
    p["w_q_t"], p["b_q"] = linear_init(keys[1], keys[2], H, H)
    p["w_k_t"], p["b_k"] = linear_init(keys[3], keys[4], H, H)
    p["w_v_t"], p["b_v"] = linear_init(keys[5], keys[6], H, H)
    p["w_ao_t"], p["b_ao"] = linear_init(keys[7], keys[8], H, H)
    p["w_i_t"], p["b_i"] = linear_init(keys[9], keys[10], H, 4 * H)
    p["w_o_t"], p["b_o"] = linear_init(keys[11], keys[12], 4 * H, H)
    p["ln1_g"] = 1.0 + 0.1 * jax.random.normal(keys[13], (H,), jnp.float32)
    p["ln1_b"] = 0.1 * jax.random.normal(keys[14], (H,), jnp.float32)
    p["ln2_g"] = jnp.ones((H,), jnp.float32)
    p["ln2_b"] = jnp.zeros((H,), jnp.float32)

    out = bert_layer(x, p, n_head=n_head, tm=256)
    out = jax.block_until_ready(out)

    ref = reference_bert_layer(x, p, n_head=n_head)
    assert out.shape == (B, S, H)
    assert jnp.allclose(out, ref, atol=1e-3, rtol=1e-3), "mismatch vs reference"
    print("KERNEL_OK")
</pallas_src>

<mosaic_0001>
module attributes {stable_mosaic.version = 11 : i64} {
  func.func @_linear_kernel(%arg0: i32, %arg1: memref<16x32xf32, #tpu.memory_space<vmem>>, %arg2: memref<32x96xf32, #tpu.memory_space<vmem>>, %arg3: memref<1x96xf32, #tpu.memory_space<vmem>>, %arg4: memref<16x96xf32, #tpu.memory_space<vmem>>) attributes {dimension_semantics = [#tpu.dimension_semantics<parallel>], iteration_bounds = array<i64: 1>, scalar_prefetch = 0 : i64, scratch_operands = 0 : i64, tpu.core_type = #tpu.core_type<tc>, window_params = [{transform_indices = @transform_0, window_bounds = array<i64: 16, 32>}, {pipeline_mode = #tpu.pipeline_mode<synchronous>, transform_indices = @transform_1, window_bounds = array<i64: 32, 96>}, {pipeline_mode = #tpu.pipeline_mode<synchronous>, transform_indices = @transform_2, window_bounds = array<i64: 1, 96>}, {transform_indices = @transform_3, window_bounds = array<i64: 16, 96>}]} {
    %c0 = arith.constant 0 : index
    %c0_0 = arith.constant 0 : index
    %0 = vector.load %arg1[%c0, %c0_0] : memref<16x32xf32, #tpu.memory_space<vmem>>, vector<16x32xf32>
    %c0_1 = arith.constant 0 : index
    %c0_2 = arith.constant 0 : index
    %1 = vector.load %arg2[%c0_1, %c0_2] : memref<32x96xf32, #tpu.memory_space<vmem>>, vector<32x96xf32>
    %cst = arith.constant dense<0.000000e+00> : vector<16x96xf32>
    %2 = tpu.matmul %0, %1, %cst {dimension_numbers = #tpu.dot_dimension_numbers<[1], [0], [0], [1], [0, 0, 1, 1], [], []>} : vector<16x32xf32>, vector<32x96xf32>, vector<16x96xf32> -> vector<16x96xf32>
    %c0_3 = arith.constant 0 : index
    %c0_4 = arith.constant 0 : index
    %3 = vector.load %arg3[%c0_3, %c0_4] : memref<1x96xf32, #tpu.memory_space<vmem>>, vector<1x96xf32>
    %4 = vector.broadcast %3 : vector<1x96xf32> to vector<16x96xf32>
    %5 = arith.addf %2, %4 : vector<16x96xf32>
    %c0_5 = arith.constant 0 : index
    %c0_6 = arith.constant 0 : index
    %6 = vector.load %arg4[%c0_5, %c0_6] : memref<16x96xf32, #tpu.memory_space<vmem>>, vector<16x96xf32>
    tpu.vector_store %arg4[%c0_5, %c0_6], %5 {strides = array<i32>} : memref<16x96xf32, #tpu.memory_space<vmem>>, vector<16x96xf32>,
    return
  }
  func.func @transform_0(%arg0: i32) -> (i32, i32) {
    %c0_i32 = arith.constant 0 : i32
    %c0_i32_0 = arith.constant 0 : i32
    return %arg0, %c0_i32 : i32, i32
  }
  func.func @transform_1(%arg0: i32) -> (i32, i32) {
    %c0_i32 = arith.constant 0 : i32
    %c0_i32_0 = arith.constant 0 : i32
    %c0_i32_1 = arith.constant 0 : i32
    return %c0_i32, %c0_i32_0 : i32, i32
  }
  func.func @transform_2(%arg0: i32) -> (i32, i32) {
    %c0_i32 = arith.constant 0 : i32
    %c0_i32_0 = arith.constant 0 : i32
    %c0_i32_1 = arith.constant 0 : i32
    return %c0_i32, %c0_i32_0 : i32, i32
  }
  func.func @transform_3(%arg0: i32) -> (i32, i32) {
    %c0_i32 = arith.constant 0 : i32
    %c0_i32_0 = arith.constant 0 : i32
    return %arg0, %c0_i32 : i32, i32
  }
}

</mosaic_0001>

<llo_original>
// kernel: tpu_custom_call.1
$region0: #{tpu_custom_call.1}
  #allocation0 [shape = 'u32[]', space=smem, size = 0x4, offset = 0x4, fixed_abs, tag = 'smem constant byte address 0x4 - core index']
  #allocation1 [shape = 'u32[144,128]{1,0:T(1,128)}', space=vmem, size = 0x12000, scoped, tag = 'internal scratch']
  %s0 = inlined_call_operand.hbm [shape: f32[16,32], index: 0, kind: input, shape index: {}]
  %s1 = inlined_call_operand.hbm [shape: f32[32,96], index: 1, kind: input, shape index: {}]
  %s2 = inlined_call_operand.hbm [shape: f32[1,96], index: 2, kind: input, shape index: {}]
  %s3 = inlined_call_operand.hbm [shape: f32[16,96], index: 3, kind: output, shape index: {}]
  %s4 = sld [smem:[#allocation0]]
  $region34: #{tpu_custom_call.1} parent=0
    _
  %s6 = ssub.s32 1, %s4
  %s7 = scalar_select 0, %s6, %s4
  $region1: #{tpu_custom_call.1} parent=0
    #allocation2 [shape = 'u8[8192]{0}', space=vmem, size = 0x2000, scoped, tag = 'input window, operand 0, single buffered']
    #allocation3 [shape = 's32[1]{0}', space=sflag, size = 0x4, scoped, tag = 'scoped memory for tpu_custom_call.1']
    #allocation4 [shape = 's32[1]{0}', space=sflag, size = 0x4, scoped, tag = 'scoped memory for tpu_custom_call.1']
    #allocation5 [shape = 'u8[16384]{0}', space=vmem, size = 0x4000, scoped, tag = 'input window, operand 1, single buffered']
    #allocation6 [shape = 's32[1]{0}', space=sflag, size = 0x4, scoped, tag = 'scoped memory for tpu_custom_call.1']
    #allocation7 [shape = 'u8[512]{0}', space=vmem, size = 0x400, scoped, tag = 'input window, operand 2, single buffered']
    #allocation8 [shape = 'u8[8192]{0}', space=vmem, size = 0x2000, scoped, tag = 'output window, operand 0, single buffered']
    %8 = vsyncpa [#allocation3], 0
    %9 = vsyncpa [#allocation6], 0
    %10 = vsyncpa [#allocation4], 0
    // Predicated region
    $region2: #{tpu_custom_call.1} parent=1 // pred_check
      _
    $region3: #{tpu_custom_call.1} parent=1 // pred_check_branch
      %12 = sbr.rel (0) target = $region5
    $region4: #{tpu_custom_call.1} parent=1 // pred_region
      %s14 = ssub.s32 256, 256
      %15 = vsyncadd [#allocation3], %s14
      %s16 = sshll.u32 [#allocation2], 4
      %s17 = int_to_ptr.vmem [resolvable:$true] %s16
      %22 = dma.hbm_to_vmem [thread:$0]  %s0, 256, %s17, [#allocation3], 128, 128, 8
    $region5: #{tpu_custom_call.1} parent=1 // pred_fallthru
      _
    // Predicated region
    $region6: #{tpu_custom_call.1} parent=1 // pred_check
      _
    $region7: #{tpu_custom_call.1} parent=1 // pred_check_branch
      %24 = sbr.rel (0) target = $region9
    $region8: #{tpu_custom_call.1} parent=1 // pred_region
      %s26 = ssub.s32 512, 512
      %27 = vsyncadd [#allocation6], %s26
      %s28 = sshll.u32 [#allocation5], 4
      %s29 = int_to_ptr.vmem [resolvable:$true] %s28
      %34 = dma.hbm_to_vmem [thread:$0]  %s1, 512, %s29, [#allocation6], 128, 128, 8
    $region9: #{tpu_custom_call.1} parent=1 // pred_fallthru
      _
    // Predicated region
    $region10: #{tpu_custom_call.1} parent=1 // pred_check
      _
    $region11: #{tpu_custom_call.1} parent=1 // pred_check_branch
      %36 = sbr.rel (0) target = $region13
    $region12: #{tpu_custom_call.1} parent=1 // pred_region
      %s38 = ssub.s32 16, 16
      %39 = vsyncadd [#allocation6], %s38
      %s41 = sshll.u32 [#allocation7], 4
      %s42 = int_to_ptr.vmem [resolvable:$true] %s41
      %44 = dma.hbm_to_vmem [thread:$0]  %s2, 16, %s42, [#allocation6]
    $region13: #{tpu_custom_call.1} parent=1 // pred_fallthru
      _
    // Predicated region
    $region14: #{tpu_custom_call.1} parent=1 // pred_check
      _
    $region15: #{tpu_custom_call.1} parent=1 // pred_check_branch
      %46 = sbr.rel (0) target = $region17
    $region16: #{tpu_custom_call.1} parent=1 // pred_region
      %47 = dma.done [#allocation3], 256
    $region17: #{tpu_custom_call.1} parent=1 // pred_fallthru
      _
    // Predicated region
    $region18: #{tpu_custom_call.1} parent=1 // pred_check
      _
    $region19: #{tpu_custom_call.1} parent=1 // pred_check_branch
      %49 = sbr.rel (0) target = $region21
    $region20: #{tpu_custom_call.1} parent=1 // pred_region
      %50 = dma.done [#allocation6], 512
    $region21: #{tpu_custom_call.1} parent=1 // pred_fallthru
      _
    // Predicated region
    $region22: #{tpu_custom_call.1} parent=1 // pred_check
      _
    $region23: #{tpu_custom_call.1} parent=1 // pred_check_branch
      %52 = sbr.rel (0) target = $region25
    $region24: #{tpu_custom_call.1} parent=1 // pred_region
      %53 = dma.done [#allocation6], 16
    $region25: #{tpu_custom_call.1} parent=1 // pred_fallthru
      _
    %v54 = vld [vmem:[#allocation2] sm:$0xff]
    %v55 = vld [vmem:[#allocation2 + $0x8] sm:$0xff]
    %v56 = vld [vmem:[#allocation5] sm:$0xff]
    %v57 = vld [vmem:[#allocation5 + $0x8] sm:$0xff]
    %v58 = vld [vmem:[#allocation5 + $0x10] sm:$0xff]
    %v59 = vld [vmem:[#allocation5 + $0x18] sm:$0xff]
    %v60 = vld [vmem:[#allocation7] sm:$0x1]
    %v62 = vlaneseq
    %v63 = vshrl.u32 %v62, 7
    %v64 = vsub.s32 0, %v63
    %v65 = vrot.slane %v60, %v64
    %vm67 = vcmask 261120
    %v69 = vsel %vm67, %v54, 0
    %v72 = vsel %vm67, %v55, 0
    %74 = vmatprep.subr.mxu0 0.0
    %75 = vmatpush1.msra.mxu0 %v56
    %76 = vmatprep.subr.mxu0 0.0
    %77 = vmatpush1.msra.mxu0 %v57
    %78 = vmatprep.subr.mxu0 0.0
    %79 = vmatpush1.msra.mxu0 %v58
    %80 = vmatprep.subr.mxu0 0.0
    %81 = vmatpush1.msra.mxu0 %v59
    %82 = vmatprep.subr.mxu0 0.0
    %83 = vmatpush1.msra.mxu0 0.0
    %84 = vmatprep.subr.mxu0 0.0
    %85 = vmatpush1.msra.mxu0 0.0
    %86 = vmatprep.subr.mxu0 0.0
    %87 = vmatpush1.msra.mxu0 0.0
    %88 = vmatprep.subr.mxu0 0.0
    %89 = vmatpush1.msra.mxu0 0.0
    %90 = vmatprep.subr.mxu0 0.0
    %91 = vmatpush1.msra.mxu0 0.0
    %92 = vmatprep.subr.mxu0 0.0
    %93 = vmatpush1.msra.mxu0 0.0
    %94 = vmatprep.subr.mxu0 0.0
    %95 = vmatpush1.msra.mxu0 0.0
    %96 = vmatprep.subr.mxu0 0.0
    %97 = vmatpush1.msra.mxu0 0.0
    %98 = vmatprep.subr.mxu0 0.0
    %99 = vmatpush1.msra.mxu0 0.0
    %100 = vmatprep.subr.mxu0 0.0
    %101 = vmatpush1.msra.mxu0 0.0
    %102 = vmatprep.subr.mxu0 0.0
    %103 = vmatpush1.msra.mxu0 0.0
    %104 = vmatprep.subr.mxu0 0.0
    %105 = vmatpush1.msra.mxu0 0.0
    %106 = vmatprep.subr.mxu0 0.0
    %107 = vmatpush1.msra.mxu0 0.0
    %108 = vmatprep.subr.mxu0 0.0
    %109 = vmatpush1.msra.mxu0 0.0
    %110 = vmatprep.subr.mxu0 0.0
    %111 = vmatpush1.msra.mxu0 0.0
    %112 = vmatprep.subr.mxu0 0.0
    %113 = vmatpush1.msra.mxu0 0.0
    %114 = vmatprep.subr.mxu0 0.0
    %115 = vmatpush1.msra.mxu0 0.0
    %116 = vmatprep.subr.mxu0 0.0
    %117 = vmatpush1.msra.mxu0 0.0
    %118 = vmatprep.subr.mxu0 0.0
    %119 = vmatpush1.msra.mxu0 0.0
    %120 = vmatprep.subr.mxu0 0.0
    %121 = vmatpush1.msra.mxu0 0.0
    %122 = vmatprep.subr.mxu0 0.0
    %123 = vmatpush1.msra.mxu0 0.0
    %124 = vmatprep.subr.mxu0 0.0
    %125 = vmatpush1.msra.mxu0 0.0
    %126 = vmatprep.subr.mxu0 0.0
    %127 = vmatpush1.msra.mxu0 0.0
    %128 = vmatprep.subr.mxu0 0.0
    %129 = vmatpush1.msra.mxu0 0.0
    %130 = vmatprep.subr.mxu0 0.0
    %131 = vmatpush1.msra.mxu0 0.0
    %132 = vmatprep.subr.mxu0 0.0
    %133 = vmatpush1.msra.mxu0 0.0
    %134 = vmatprep.subr.mxu0 0.0
    %135 = vmatpush1.msra.mxu0 0.0
    %136 = vmatprep.subr.mxu0 0.0
    %137 = vmatpush1.msra.mxu0 0.0
    %138 = vmatprep.mubr.f32.mxu0 0.0
    %139 = vmatmul.mubr.f32.gmra.mrb[0].mxu0 %v69
    %v140 = vpop.f32.mrb[0].mxu0
    %v141 = vadd.f32 %v65, %v140
    %v142 = vpop.f32.mrb[0].mxu0
    %143 = vmatprep.mubr.f32.mxu0 0.0
    %144 = vmatmul.mubr.f32.gmra.mrb[0].mxu0 %v72
    %v145 = vpop.f32.mrb[0].mxu0
    %v146 = vadd.f32 %v65, %v145
    %v147 = vpop.f32.mrb[0].mxu0
    %148 = vdwg.mxu0
    %vm149 = vcmask 785408
    %150 = vst.msk [vmem:[#allocation8] sm:$0xff] %vm149, %v141
    %151 = vst.msk [vmem:[#allocation8 + $0x8] sm:$0xff] %vm149, %v146
    // Predicated region
    $region26: #{tpu_custom_call.1} parent=1 // pred_check
      _
    $region27: #{tpu_custom_call.1} parent=1 // pred_check_branch
      %153 = sbr.rel (0) target = $region29
    $region28: #{tpu_custom_call.1} parent=1 // pred_region
      %s155 = ssub.s32 256, 256
      %156 = vsyncadd [#allocation4], %s155
      %s157 = sshll.u32 [#allocation8], 4
      %s158 = int_to_ptr.vmem [resolvable:$true] %s157
      %163 = dma.vmem_to_hbm [thread:$0]  %s158, 256, %s3, [#allocation4], 128, 128, 8
    $region29: #{tpu_custom_call.1} parent=1 // pred_fallthru
      _
    // Predicated region
    $region30: #{tpu_custom_call.1} parent=1 // pred_check
      _
    $region31: #{tpu_custom_call.1} parent=1 // pred_check_branch
      %165 = sbr.rel (0) target = $region33
    $region32: #{tpu_custom_call.1} parent=1 // pred_region
      %166 = dma.done [#allocation4], 256
    $region33: #{tpu_custom_call.1} parent=1 // pred_fallthru
      _
    %167 = vsyncpa [#allocation3], 1
    %168 = vsyncpa [#allocation6], 1
    %169 = vsyncpa [#allocation4], 1

</llo_original>
